<compile_context>
chip_gen: v5e
topology: v5e:2x2
jax: 0.10.0
libtpu: 0.0.40
codegen_flags: <defaults>
</compile_context>

<pallas_src>
from functools import partial

import jax
import jax.numpy as jnp
import numpy as np
from jax import lax
from jax.experimental import pallas as pl
from jax.experimental.pallas import tpu as pltpu

_LANE = 128  # lane width for the lane-dense head output


def _lstm_lp_kernel(x_ref, h0_ref, c0_ref, wih_ref, whh_ref, b_ref,
                    ws_ref, bs_ref,
                    ns_ref, hT_ref, cT_ref,
                    hh_sc):
    TB, _ = x_ref.shape
    Bp, H = h0_ref.shape
    T = TB // Bp

    # ---- Batched input projection (hoisted, kept as a value — no scratch) ----
    # (T*Bp, D) @ (D, 4H) + bias.  At these sizes this is ~T*Bp/8 vregs, well
    # within the 64-vreg file, so no VMEM round-trip is needed.
    pre = jnp.dot(x_ref[...], wih_ref[...],
                  preferred_element_type=jnp.float32) + b_ref[...]     # (T*Bp, 4H)

    # TODO(synk): for accuracy budgets that allow it, cast whh (and h) to bf16
    # here to cut MXU passes on the serial recurrent matmul.
    whh = whh_ref[...]                                                 # (H, 4H)

    h = h0_ref[...]                                                    # (Bp, H)
    c = c0_ref[...]                                                    # (Bp, H)

    # ---- Recurrence: only the h-dependent matmul + activations are serial ----
    # T is small and static: a static Python loop gives compile-time (Bp, 4H)
    # slices of `pre` and static-offset stores into hh_sc (no dynamic indexing,
    # no relayout).
    for t in range(T):
        gates = pre[t * Bp:(t + 1) * Bp, :] + jnp.dot(
            h, whh, preferred_element_type=jnp.float32)                # (Bp, 4H)
        # 2 full-width EUP activations instead of 5 quarter-width ones.
        sig = jax.nn.sigmoid(gates)
        th = jnp.tanh(gates)
        i_g = sig[:, 0 * H:1 * H]
        f_g = sig[:, 1 * H:2 * H]
        g_g = th[:, 2 * H:3 * H]
        o_g = sig[:, 3 * H:4 * H]
        c = f_g * c + i_g * g_g
        h = o_g * jnp.tanh(c)
        hh_sc[t * Bp:(t + 1) * Bp, :] = h        # collect hidden history (static slice)

    # Final carries written exactly once.
    hT_ref[...] = h.astype(hT_ref.dtype)
    cT_ref[...] = c.astype(cT_ref.dtype)

    # ---- Batched, lane-dense Linear head (hoisted out of the recurrence) -----
    # (T*Bp, H) @ (H, 128) + bias -> one unmasked, lane-dense output store.
    ns = jnp.dot(hh_sc[...], ws_ref[...],
                 preferred_element_type=jnp.float32) + bs_ref[...]
    ns_ref[...] = ns.astype(ns_ref.dtype)


@jax.jit
def latent_predictor_forward(tau, hidden, params):
    """tau: (B, T, D) float32 (batch_first); hidden = (h0, c0) each (1, B, H)."""
    w_ih, w_hh, b_ih, b_hh, w_s, b_s = (params[k] for k in
                                        ("w_ih", "w_hh", "b_ih", "b_hh", "w_s", "b_s"))
    B, T, D = tau.shape
    H = w_hh.shape[1]
    S = w_s.shape[0]
    Bp = max(8, -(-B // 8) * 8)          # pad batch to a sublane multiple (>= 8)
    Sp = _LANE                           # lane-dense head output width

    # Time-major input, batch padded with zeros (padded rows compute finite junk
    # that is sliced away below).  All reshapes live in the (jitted) wrapper so
    # the kernel only ever sees 2-D, (8,128)-aligned tiles.
    x_tm = jnp.transpose(tau, (1, 0, 2)).astype(jnp.float32)          # (T, B, D)
    h0 = hidden[0][0].astype(jnp.float32)                             # (B, H)
    c0 = hidden[1][0].astype(jnp.float32)                             # (B, H)
    if Bp != B:
        x_tm = jnp.pad(x_tm, ((0, 0), (0, Bp - B), (0, 0)))
        h0 = jnp.pad(h0, ((0, Bp - B), (0, 0)))
        c0 = jnp.pad(c0, ((0, Bp - B), (0, 0)))
    x2d = x_tm.reshape(T * Bp, D)                                     # (T*Bp, D)

    wih_t = w_ih.T.astype(jnp.float32)                                # (D, 4H)
    whh_t = w_hh.T.astype(jnp.float32)                                # (H, 4H)
    bias = (b_ih + b_hh).reshape(1, 4 * H).astype(jnp.float32)        # (1, 4H)
    # Zero-pad the head to 128 output lanes so the kernel's output store is
    # lane-dense (unmasked vst) and the head matmul uses full MXU lanes.
    ws_t = jnp.zeros((H, Sp), jnp.float32).at[:, :S].set(w_s.T.astype(jnp.float32))
    bs = jnp.zeros((1, Sp), jnp.float32).at[:, :S].set(
        b_s.reshape(1, S).astype(jnp.float32))

    vmem = pl.BlockSpec(memory_space=pltpu.MemorySpace.VMEM)

    # TODO(synk): for production T/Bp re-budget VMEM residency for v7x (64 MiB
    # physical / 32 MiB scoped default): raise vmem_limit_bytes or switch to a
    # time-chunked 'arbitrary' grid with h/c carried in VMEM scratch.
    # TODO(synk): for Bp >= 16 on v7x, split the batch across the two
    # TensorCores (core-parallel leading axis); pointless at B=2.
    ns2d, h_T, c_T = pl.pallas_call(
        _lstm_lp_kernel,
        out_shape=(
            jax.ShapeDtypeStruct((T * Bp, Sp), jnp.float32),
            jax.ShapeDtypeStruct((Bp, H), jnp.float32),
            jax.ShapeDtypeStruct((Bp, H), jnp.float32),
        ),
        in_specs=[vmem] * 8,
        out_specs=(vmem, vmem, vmem),
        scratch_shapes=[
            pltpu.VMEM((T * Bp, H), jnp.float32),   # hidden-state history (2-D)
        ],
    )(x2d, h0, c0, wih_t, whh_t, bias, ws_t, bs)

    ns_tm = ns2d.reshape(T, Bp, Sp)
    next_state = jnp.transpose(ns_tm, (1, 0, 2))[:B, :, :S]           # (B, T, S)
    return next_state, (h_T[:B][None], c_T[:B][None])


def _reference_forward(tau, hidden, params):
    """Pure-JAX reference replicating torch.nn.LSTM(batch_first=True) + Linear."""
    w_ih, w_hh, b_ih, b_hh, w_s, b_s = (params[k] for k in
                                        ("w_ih", "w_hh", "b_ih", "b_hh", "w_s", "b_s"))
    H = w_hh.shape[1]
    h0, c0 = hidden[0][0], hidden[1][0]

    def step(carry, x_t):
        h, c = carry
        gates = x_t @ w_ih.T + h @ w_hh.T + b_ih + b_hh
        i = jax.nn.sigmoid(gates[:, 0 * H:1 * H])
        f = jax.nn.sigmoid(gates[:, 1 * H:2 * H])
        g = jnp.tanh(gates[:, 2 * H:3 * H])
        o = jax.nn.sigmoid(gates[:, 3 * H:4 * H])
        c_new = f * c + i * g
        h_new = o * jnp.tanh(c_new)
        return (h_new, c_new), h_new

    (h_T, c_T), outs = lax.scan(step, (h0, c0), jnp.transpose(tau, (1, 0, 2)))
    output = jnp.transpose(outs, (1, 0, 2))
    next_state = output @ w_s.T + b_s
    return next_state, (h_T[None], c_T[None])


if __name__ == "__main__":
    # Small shapes consistent with the module.
    B, T = 2, 8
    LP_INPUT_DIM, HIDDEN_DIM, STATE_DIM = 16, 32, 8

    key = jax.random.PRNGKey(0)
    ks = jax.random.split(key, 9)
    k_bound = 1.0 / np.sqrt(HIDDEN_DIM)

    params = {
        "w_ih": jax.random.uniform(ks[0], (4 * HIDDEN_DIM, LP_INPUT_DIM),
                                   minval=-k_bound, maxval=k_bound, dtype=jnp.float32),
        "w_hh": jax.random.uniform(ks[1], (4 * HIDDEN_DIM, HIDDEN_DIM),
                                   minval=-k_bound, maxval=k_bound, dtype=jnp.float32),
        "b_ih": jax.random.uniform(ks[2], (4 * HIDDEN_DIM,),
                                   minval=-k_bound, maxval=k_bound, dtype=jnp.float32),
        "b_hh": jax.random.uniform(ks[3], (4 * HIDDEN_DIM,),
                                   minval=-k_bound, maxval=k_bound, dtype=jnp.float32),
        "w_s": jax.random.uniform(ks[4], (STATE_DIM, HIDDEN_DIM),
                                  minval=-k_bound, maxval=k_bound, dtype=jnp.float32),
        "b_s": jax.random.uniform(ks[5], (STATE_DIM,),
                                  minval=-k_bound, maxval=k_bound, dtype=jnp.float32),
    }

    tau = jax.random.normal(ks[6], (B, T, LP_INPUT_DIM), dtype=jnp.float32)
    h0 = jax.random.normal(ks[7], (1, B, HIDDEN_DIM), dtype=jnp.float32)
    c0 = jax.random.normal(ks[8], (1, B, HIDDEN_DIM), dtype=jnp.float32)

    next_state, (h_T, c_T) = latent_predictor_forward(tau, (h0, c0), params)
    jax.block_until_ready((next_state, h_T, c_T))

    ref_ns, (ref_h, ref_c) = _reference_forward(tau, (h0, c0), params)
    np.testing.assert_allclose(np.asarray(next_state), np.asarray(ref_ns),
                               rtol=1e-5, atol=1e-5)
    np.testing.assert_allclose(np.asarray(h_T), np.asarray(ref_h), rtol=1e-5, atol=1e-5)
    np.testing.assert_allclose(np.asarray(c_T), np.asarray(ref_c), rtol=1e-5, atol=1e-5)

    print("KERNEL_OK")
</pallas_src>

<mosaic_0001>
module attributes {stable_mosaic.version = 11 : i64} {
  func.func @_lstm_lp_kernel(%arg0: memref<64x16xf32, #tpu.memory_space<vmem>>, %arg1: memref<8x32xf32, #tpu.memory_space<vmem>>, %arg2: memref<8x32xf32, #tpu.memory_space<vmem>>, %arg3: memref<16x128xf32, #tpu.memory_space<vmem>>, %arg4: memref<32x128xf32, #tpu.memory_space<vmem>>, %arg5: memref<1x128xf32, #tpu.memory_space<vmem>>, %arg6: memref<32x128xf32, #tpu.memory_space<vmem>>, %arg7: memref<1x128xf32, #tpu.memory_space<vmem>>, %arg8: memref<64x128xf32, #tpu.memory_space<vmem>>, %arg9: memref<8x32xf32, #tpu.memory_space<vmem>>, %arg10: memref<8x32xf32, #tpu.memory_space<vmem>>, %arg11: memref<64x32xf32, #tpu.memory_space<vmem>>) attributes {dimension_semantics = [], scalar_prefetch = 0 : i64, scratch_operands = 1 : i64, tpu.core_type = #tpu.core_type<tc>} {
    %c0 = arith.constant 0 : index
    %c0_0 = arith.constant 0 : index
    %0 = vector.load %arg0[%c0, %c0_0] : memref<64x16xf32, #tpu.memory_space<vmem>>, vector<64x16xf32>
    %c0_1 = arith.constant 0 : index
    %c0_2 = arith.constant 0 : index
    %1 = vector.load %arg3[%c0_1, %c0_2] : memref<16x128xf32, #tpu.memory_space<vmem>>, vector<16x128xf32>
    %cst = arith.constant dense<0.000000e+00> : vector<64x128xf32>
    %2 = tpu.matmul %0, %1, %cst {dimension_numbers = #tpu.dot_dimension_numbers<[1], [0], [0], [1], [0, 0, 1, 1], [], []>} : vector<64x16xf32>, vector<16x128xf32>, vector<64x128xf32> -> vector<64x128xf32>
    %c0_3 = arith.constant 0 : index
    %c0_4 = arith.constant 0 : index
    %3 = vector.load %arg5[%c0_3, %c0_4] : memref<1x128xf32, #tpu.memory_space<vmem>>, vector<1x128xf32>
    %4 = vector.broadcast %3 : vector<1x128xf32> to vector<64x128xf32>
    %5 = arith.addf %2, %4 : vector<64x128xf32>
    %c0_5 = arith.constant 0 : index
    %c0_6 = arith.constant 0 : index
    %6 = vector.load %arg4[%c0_5, %c0_6] : memref<32x128xf32, #tpu.memory_space<vmem>>, vector<32x128xf32>
    %c0_7 = arith.constant 0 : index
    %c0_8 = arith.constant 0 : index
    %7 = vector.load %arg1[%c0_7, %c0_8] : memref<8x32xf32, #tpu.memory_space<vmem>>, vector<8x32xf32>
    %c0_9 = arith.constant 0 : index
    %c0_10 = arith.constant 0 : index
    %8 = vector.load %arg2[%c0_9, %c0_10] : memref<8x32xf32, #tpu.memory_space<vmem>>, vector<8x32xf32>
    %9 = vector.extract_strided_slice %5 {offsets = [0, 0], sizes = [8, 128], strides = [1, 1]} : vector<64x128xf32> to vector<8x128xf32>
    %cst_11 = arith.constant dense<0.000000e+00> : vector<8x128xf32>
    %10 = tpu.matmul %7, %6, %cst_11 {dimension_numbers = #tpu.dot_dimension_numbers<[1], [0], [0], [1], [0, 0, 1, 1], [], []>} : vector<8x32xf32>, vector<32x128xf32>, vector<8x128xf32> -> vector<8x128xf32>
    %11 = arith.addf %9, %10 : vector<8x128xf32>
    %12 = arith.negf %11 : vector<8x128xf32>
    %13 = math.exp %12 : vector<8x128xf32>
    %cst_12 = arith.constant 1.000000e+00 : f32
    %14 = vector.broadcast %cst_12 : f32 to vector<8x128xf32>
    %15 = arith.addf %14, %13 : vector<8x128xf32>
    %16 = arith.divf %14, %15 : vector<8x128xf32>
    %17 = math.tanh %11 : vector<8x128xf32>
    %18 = vector.extract_strided_slice %16 {offsets = [0, 0], sizes = [8, 32], strides = [1, 1]} : vector<8x128xf32> to vector<8x32xf32>
    %19 = vector.extract_strided_slice %16 {offsets = [0, 32], sizes = [8, 32], strides = [1, 1]} : vector<8x128xf32> to vector<8x32xf32>
    %20 = vector.extract_strided_slice %17 {offsets = [0, 64], sizes = [8, 32], strides = [1, 1]} : vector<8x128xf32> to vector<8x32xf32>
    %21 = vector.extract_strided_slice %16 {offsets = [0, 96], sizes = [8, 32], strides = [1, 1]} : vector<8x128xf32> to vector<8x32xf32>
    %22 = arith.mulf %19, %8 : vector<8x32xf32>
    %23 = arith.mulf %18, %20 : vector<8x32xf32>
    %24 = arith.addf %22, %23 : vector<8x32xf32>
    %25 = math.tanh %24 : vector<8x32xf32>
    %26 = arith.mulf %21, %25 : vector<8x32xf32>
    %c0_13 = arith.constant 0 : index
    %c0_14 = arith.constant 0 : index
    %27 = vector.load %arg11[%c0_13, %c0_14] : memref<64x32xf32, #tpu.memory_space<vmem>>, vector<8x32xf32>
    tpu.vector_store %arg11[%c0_13, %c0_14], %26 {strides = array<i32>} : memref<64x32xf32, #tpu.memory_space<vmem>>, vector<8x32xf32>,
    %28 = vector.extract_strided_slice %5 {offsets = [8, 0], sizes = [8, 128], strides = [1, 1]} : vector<64x128xf32> to vector<8x128xf32>
    %cst_15 = arith.constant dense<0.000000e+00> : vector<8x128xf32>
    %29 = tpu.matmul %26, %6, %cst_15 {dimension_numbers = #tpu.dot_dimension_numbers<[1], [0], [0], [1], [0, 0, 1, 1], [], []>} : vector<8x32xf32>, vector<32x128xf32>, vector<8x128xf32> -> vector<8x128xf32>
    %30 = arith.addf %28, %29 : vector<8x128xf32>
    %31 = arith.negf %30 : vector<8x128xf32>
    %32 = math.exp %31 : vector<8x128xf32>
    %cst_16 = arith.constant 1.000000e+00 : f32
    %33 = vector.broadcast %cst_16 : f32 to vector<8x128xf32>
    %34 = arith.addf %33, %32 : vector<8x128xf32>
    %35 = arith.divf %33, %34 : vector<8x128xf32>
    %36 = math.tanh %30 : vector<8x128xf32>
    %37 = vector.extract_strided_slice %35 {offsets = [0, 0], sizes = [8, 32], strides = [1, 1]} : vector<8x128xf32> to vector<8x32xf32>
    %38 = vector.extract_strided_slice %35 {offsets = [0, 32], sizes = [8, 32], strides = [1, 1]} : vector<8x128xf32> to vector<8x32xf32>
    %39 = vector.extract_strided_slice %36 {offsets = [0, 64], sizes = [8, 32], strides = [1, 1]} : vector<8x128xf32> to vector<8x32xf32>
    %40 = vector.extract_strided_slice %35 {offsets = [0, 96], sizes = [8, 32], strides = [1, 1]} : vector<8x128xf32> to vector<8x32xf32>
    %41 = arith.mulf %38, %24 : vector<8x32xf32>
    %42 = arith.mulf %37, %39 : vector<8x32xf32>
    %43 = arith.addf %41, %42 : vector<8x32xf32>
    %44 = math.tanh %43 : vector<8x32xf32>
    %45 = arith.mulf %40, %44 : vector<8x32xf32>
    %c8 = arith.constant 8 : index
    %c0_17 = arith.constant 0 : index
    %46 = vector.load %arg11[%c8, %c0_17] : memref<64x32xf32, #tpu.memory_space<vmem>>, vector<8x32xf32>
    tpu.vector_store %arg11[%c8, %c0_17], %45 {strides = array<i32>} : memref<64x32xf32, #tpu.memory_space<vmem>>, vector<8x32xf32>,
    %47 = vector.extract_strided_slice %5 {offsets = [16, 0], sizes = [8, 128], strides = [1, 1]} : vector<64x128xf32> to vector<8x128xf32>
    %cst_18 = arith.constant dense<0.000000e+00> : vector<8x128xf32>
    %48 = tpu.matmul %45, %6, %cst_18 {dimension_numbers = #tpu.dot_dimension_numbers<[1], [0], [0], [1], [0, 0, 1, 1], [], []>} : vector<8x32xf32>, vector<32x128xf32>, vector<8x128xf32> -> vector<8x128xf32>
    %49 = arith.addf %47, %48 : vector<8x128xf32>
    %50 = arith.negf %49 : vector<8x128xf32>
    %51 = math.exp %50 : vector<8x128xf32>
    %cst_19 = arith.constant 1.000000e+00 : f32
    %52 = vector.broadcast %cst_19 : f32 to vector<8x128xf32>
    %53 = arith.addf %52, %51 : vector<8x128xf32>
    %54 = arith.divf %52, %53 : vector<8x128xf32>
    %55 = math.tanh %49 : vector<8x128xf32>
    %56 = vector.extract_strided_slice %54 {offsets = [0, 0], sizes = [8, 32], strides = [1, 1]} : vector<8x128xf32> to vector<8x32xf32>
    %57 = vector.extract_strided_slice %54 {offsets = [0, 32], sizes = [8, 32], strides = [1, 1]} : vector<8x128xf32> to vector<8x32xf32>
    %58 = vector.extract_strided_slice %55 {offsets = [0, 64], sizes = [8, 32], strides = [1, 1]} : vector<8x128xf32> to vector<8x32xf32>
    %59 = vector.extract_strided_slice %54 {offsets = [0, 96], sizes = [8, 32], strides = [1, 1]} : vector<8x128xf32> to vector<8x32xf32>
    %60 = arith.mulf %57, %43 : vector<8x32xf32>
    %61 = arith.mulf %56, %58 : vector<8x32xf32>
    %62 = arith.addf %60, %61 : vector<8x32xf32>
    %63 = math.tanh %62 : vector<8x32xf32>
    %64 = arith.mulf %59, %63 : vector<8x32xf32>
    %c16 = arith.constant 16 : index
    %c0_20 = arith.constant 0 : index
    %65 = vector.load %arg11[%c16, %c0_20] : memref<64x32xf32, #tpu.memory_space<vmem>>, vector<8x32xf32>
    tpu.vector_store %arg11[%c16, %c0_20], %64 {strides = array<i32>} : memref<64x32xf32, #tpu.memory_space<vmem>>, vector<8x32xf32>,
    %66 = vector.extract_strided_slice %5 {offsets = [24, 0], sizes = [8, 128], strides = [1, 1]} : vector<64x128xf32> to vector<8x128xf32>
    %cst_21 = arith.constant dense<0.000000e+00> : vector<8x128xf32>
    %67 = tpu.matmul %64, %6, %cst_21 {dimension_numbers = #tpu.dot_dimension_numbers<[1], [0], [0], [1], [0, 0, 1, 1], [], []>} : vector<8x32xf32>, vector<32x128xf32>, vector<8x128xf32> -> vector<8x128xf32>
    %68 = arith.addf %66, %67 : vector<8x128xf32>
    %69 = arith.negf %68 : vector<8x128xf32>
    %70 = math.exp %69 : vector<8x128xf32>
    %cst_22 = arith.constant 1.000000e+00 : f32
    %71 = vector.broadcast %cst_22 : f32 to vector<8x128xf32>
    %72 = arith.addf %71, %70 : vector<8x128xf32>
    %73 = arith.divf %71, %72 : vector<8x128xf32>
    %74 = math.tanh %68 : vector<8x128xf32>
    %75 = vector.extract_strided_slice %73 {offsets = [0, 0], sizes = [8, 32], strides = [1, 1]} : vector<8x128xf32> to vector<8x32xf32>
    %76 = vector.extract_strided_slice %73 {offsets = [0, 32], sizes = [8, 32], strides = [1, 1]} : vector<8x128xf32> to vector<8x32xf32>
    %77 = vector.extract_strided_slice %74 {offsets = [0, 64], sizes = [8, 32], strides = [1, 1]} : vector<8x128xf32> to vector<8x32xf32>
    %78 = vector.extract_strided_slice %73 {offsets = [0, 96], sizes = [8, 32], strides = [1, 1]} : vector<8x128xf32> to vector<8x32xf32>
    %79 = arith.mulf %76, %62 : vector<8x32xf32>
    %80 = arith.mulf %75, %77 : vector<8x32xf32>
    %81 = arith.addf %79, %80 : vector<8x32xf32>
    %82 = math.tanh %81 : vector<8x32xf32>
    %83 = arith.mulf %78, %82 : vector<8x32xf32>
    %c24 = arith.constant 24 : index
    %c0_23 = arith.constant 0 : index
    %84 = vector.load %arg11[%c24, %c0_23] : memref<64x32xf32, #tpu.memory_space<vmem>>, vector<8x32xf32>
    tpu.vector_store %arg11[%c24, %c0_23], %83 {strides = array<i32>} : memref<64x32xf32, #tpu.memory_space<vmem>>, vector<8x32xf32>,
    %85 = vector.extract_strided_slice %5 {offsets = [32, 0], sizes = [8, 128], strides = [1, 1]} : vector<64x128xf32> to vector<8x128xf32>
    %cst_24 = arith.constant dense<0.000000e+00> : vector<8x128xf32>
    %86 = tpu.matmul %83, %6, %cst_24 {dimension_numbers = #tpu.dot_dimension_numbers<[1], [0], [0], [1], [0, 0, 1, 1], [], []>} : vector<8x32xf32>, vector<32x128xf32>, vector<8x128xf32> -> vector<8x128xf32>
    %87 = arith.addf %85, %86 : vector<8x128xf32>
    %88 = arith.negf %87 : vector<8x128xf32>
    %89 = math.exp %88 : vector<8x128xf32>
    %cst_25 = arith.constant 1.000000e+00 : f32
    %90 = vector.broadcast %cst_25 : f32 to vector<8x128xf32>
    %91 = arith.addf %90, %89 : vector<8x128xf32>
    %92 = arith.divf %90, %91 : vector<8x128xf32>
    %93 = math.tanh %87 : vector<8x128xf32>
    %94 = vector.extract_strided_slice %92 {offsets = [0, 0], sizes = [8, 32], strides = [1, 1]} : vector<8x128xf32> to vector<8x32xf32>
    %95 = vector.extract_strided_slice %92 {offsets = [0, 32], sizes = [8, 32], strides = [1, 1]} : vector<8x128xf32> to vector<8x32xf32>
    %96 = vector.extract_strided_slice %93 {offsets = [0, 64], sizes = [8, 32], strides = [1, 1]} : vector<8x128xf32> to vector<8x32xf32>
    %97 = vector.extract_strided_slice %92 {offsets = [0, 96], sizes = [8, 32], strides = [1, 1]} : vector<8x128xf32> to vector<8x32xf32>
    %98 = arith.mulf %95, %81 : vector<8x32xf32>
    %99 = arith.mulf %94, %96 : vector<8x32xf32>
    %100 = arith.addf %98, %99 : vector<8x32xf32>
    %101 = math.tanh %100 : vector<8x32xf32>
    %102 = arith.mulf %97, %101 : vector<8x32xf32>
    %c32 = arith.constant 32 : index
    %c0_26 = arith.constant 0 : index
    %103 = vector.load %arg11[%c32, %c0_26] : memref<64x32xf32, #tpu.memory_space<vmem>>, vector<8x32xf32>
    tpu.vector_store %arg11[%c32, %c0_26], %102 {strides = array<i32>} : memref<64x32xf32, #tpu.memory_space<vmem>>, vector<8x32xf32>,
    %104 = vector.extract_strided_slice %5 {offsets = [40, 0], sizes = [8, 128], strides = [1, 1]} : vector<64x128xf32> to vector<8x128xf32>
    %cst_27 = arith.constant dense<0.000000e+00> : vector<8x128xf32>
    %105 = tpu.matmul %102, %6, %cst_27 {dimension_numbers = #tpu.dot_dimension_numbers<[1], [0], [0], [1], [0, 0, 1, 1], [], []>} : vector<8x32xf32>, vector<32x128xf32>, vector<8x128xf32> -> vector<8x128xf32>
    %106 = arith.addf %104, %105 : vector<8x128xf32>
    %107 = arith.negf %106 : vector<8x128xf32>
    %108 = math.exp %107 : vector<8x128xf32>
    %cst_28 = arith.constant 1.000000e+00 : f32
    %109 = vector.broadcast %cst_28 : f32 to vector<8x128xf32>
    %110 = arith.addf %109, %108 : vector<8x128xf32>
    %111 = arith.divf %109, %110 : vector<8x128xf32>
    %112 = math.tanh %106 : vector<8x128xf32>
    %113 = vector.extract_strided_slice %111 {offsets = [0, 0], sizes = [8, 32], strides = [1, 1]} : vector<8x128xf32> to vector<8x32xf32>
    %114 = vector.extract_strided_slice %111 {offsets = [0, 32], sizes = [8, 32], strides = [1, 1]} : vector<8x128xf32> to vector<8x32xf32>
    %115 = vector.extract_strided_slice %112 {offsets = [0, 64], sizes = [8, 32], strides = [1, 1]} : vector<8x128xf32> to vector<8x32xf32>
    %116 = vector.extract_strided_slice %111 {offsets = [0, 96], sizes = [8, 32], strides = [1, 1]} : vector<8x128xf32> to vector<8x32xf32>
    %117 = arith.mulf %114, %100 : vector<8x32xf32>
    %118 = arith.mulf %113, %115 : vector<8x32xf32>
    %119 = arith.addf %117, %118 : vector<8x32xf32>
    %120 = math.tanh %119 : vector<8x32xf32>
    %121 = arith.mulf %116, %120 : vector<8x32xf32>
    %c40 = arith.constant 40 : index
    %c0_29 = arith.constant 0 : index
    %122 = vector.load %arg11[%c40, %c0_29] : memref<64x32xf32, #tpu.memory_space<vmem>>, vector<8x32xf32>
    tpu.vector_store %arg11[%c40, %c0_29], %121 {strides = array<i32>} : memref<64x32xf32, #tpu.memory_space<vmem>>, vector<8x32xf32>,
    %123 = vector.extract_strided_slice %5 {offsets = [48, 0], sizes = [8, 128], strides = [1, 1]} : vector<64x128xf32> to vector<8x128xf32>
    %cst_30 = arith.constant dense<0.000000e+00> : vector<8x128xf32>
    %124 = tpu.matmul %121, %6, %cst_30 {dimension_numbers = #tpu.dot_dimension_numbers<[1], [0], [0], [1], [0, 0, 1, 1], [], []>} : vector<8x32xf32>, vector<32x128xf32>, vector<8x128xf32> -> vector<8x128xf32>
    %125 = arith.addf %123, %124 : vector<8x128xf32>
    %126 = arith.negf %125 : vector<8x128xf32>
    %127 = math.exp %126 : vector<8x128xf32>
    %cst_31 = arith.constant 1.000000e+00 : f32
    %128 = vector.broadcast %cst_31 : f32 to vector<8x128xf32>
    %129 = arith.addf %128, %127 : vector<8x128xf32>
    %130 = arith.divf %128, %129 : vector<8x128xf32>
    %131 = math.tanh %125 : vector<8x128xf32>
    %132 = vector.extract_strided_slice %130 {offsets = [0, 0], sizes = [8, 32], strides = [1, 1]} : vector<8x128xf32> to vector<8x32xf32>
    %133 = vector.extract_strided_slice %130 {offsets = [0, 32], sizes = [8, 32], strides = [1, 1]} : vector<8x128xf32> to vector<8x32xf32>
    %134 = vector.extract_strided_slice %131 {offsets = [0, 64], sizes = [8, 32], strides = [1, 1]} : vector<8x128xf32> to vector<8x32xf32>
    %135 = vector.extract_strided_slice %130 {offsets = [0, 96], sizes = [8, 32], strides = [1, 1]} : vector<8x128xf32> to vector<8x32xf32>
    %136 = arith.mulf %133, %119 : vector<8x32xf32>
    %137 = arith.mulf %132, %134 : vector<8x32xf32>
    %138 = arith.addf %136, %137 : vector<8x32xf32>
    %139 = math.tanh %138 : vector<8x32xf32>
    %140 = arith.mulf %135, %139 : vector<8x32xf32>
    %c48 = arith.constant 48 : index
    %c0_32 = arith.constant 0 : index
    %141 = vector.load %arg11[%c48, %c0_32] : memref<64x32xf32, #tpu.memory_space<vmem>>, vector<8x32xf32>
    tpu.vector_store %arg11[%c48, %c0_32], %140 {strides = array<i32>} : memref<64x32xf32, #tpu.memory_space<vmem>>, vector<8x32xf32>,
    %142 = vector.extract_strided_slice %5 {offsets = [56, 0], sizes = [8, 128], strides = [1, 1]} : vector<64x128xf32> to vector<8x128xf32>
    %cst_33 = arith.constant dense<0.000000e+00> : vector<8x128xf32>
    %143 = tpu.matmul %140, %6, %cst_33 {dimension_numbers = #tpu.dot_dimension_numbers<[1], [0], [0], [1], [0, 0, 1, 1], [], []>} : vector<8x32xf32>, vector<32x128xf32>, vector<8x128xf32> -> vector<8x128xf32>
    %144 = arith.addf %142, %143 : vector<8x128xf32>
    %145 = arith.negf %144 : vector<8x128xf32>
    %146 = math.exp %145 : vector<8x128xf32>
    %cst_34 = arith.constant 1.000000e+00 : f32
    %147 = vector.broadcast %cst_34 : f32 to vector<8x128xf32>
    %148 = arith.addf %147, %146 : vector<8x128xf32>
    %149 = arith.divf %147, %148 : vector<8x128xf32>
    %150 = math.tanh %144 : vector<8x128xf32>
    %151 = vector.extract_strided_slice %149 {offsets = [0, 0], sizes = [8, 32], strides = [1, 1]} : vector<8x128xf32> to vector<8x32xf32>
    %152 = vector.extract_strided_slice %149 {offsets = [0, 32], sizes = [8, 32], strides = [1, 1]} : vector<8x128xf32> to vector<8x32xf32>
    %153 = vector.extract_strided_slice %150 {offsets = [0, 64], sizes = [8, 32], strides = [1, 1]} : vector<8x128xf32> to vector<8x32xf32>
    %154 = vector.extract_strided_slice %149 {offsets = [0, 96], sizes = [8, 32], strides = [1, 1]} : vector<8x128xf32> to vector<8x32xf32>
    %155 = arith.mulf %152, %138 : vector<8x32xf32>
    %156 = arith.mulf %151, %153 : vector<8x32xf32>
    %157 = arith.addf %155, %156 : vector<8x32xf32>
    %158 = math.tanh %157 : vector<8x32xf32>
    %159 = arith.mulf %154, %158 : vector<8x32xf32>
    %c56 = arith.constant 56 : index
    %c0_35 = arith.constant 0 : index
    %160 = vector.load %arg11[%c56, %c0_35] : memref<64x32xf32, #tpu.memory_space<vmem>>, vector<8x32xf32>
    tpu.vector_store %arg11[%c56, %c0_35], %159 {strides = array<i32>} : memref<64x32xf32, #tpu.memory_space<vmem>>, vector<8x32xf32>,
    %c0_36 = arith.constant 0 : index
    %c0_37 = arith.constant 0 : index
    %161 = vector.load %arg9[%c0_36, %c0_37] : memref<8x32xf32, #tpu.memory_space<vmem>>, vector<8x32xf32>
    tpu.vector_store %arg9[%c0_36, %c0_37], %159 {strides = array<i32>} : memref<8x32xf32, #tpu.memory_space<vmem>>, vector<8x32xf32>,
    %c0_38 = arith.constant 0 : index
    %c0_39 = arith.constant 0 : index
    %162 = vector.load %arg10[%c0_38, %c0_39] : memref<8x32xf32, #tpu.memory_space<vmem>>, vector<8x32xf32>
    tpu.vector_store %arg10[%c0_38, %c0_39], %157 {strides = array<i32>} : memref<8x32xf32, #tpu.memory_space<vmem>>, vector<8x32xf32>,
    %c0_40 = arith.constant 0 : index
    %c0_41 = arith.constant 0 : index
    %163 = vector.load %arg11[%c0_40, %c0_41] : memref<64x32xf32, #tpu.memory_space<vmem>>, vector<64x32xf32>
    %c0_42 = arith.constant 0 : index
    %c0_43 = arith.constant 0 : index
    %164 = vector.load %arg6[%c0_42, %c0_43] : memref<32x128xf32, #tpu.memory_space<vmem>>, vector<32x128xf32>
    %cst_44 = arith.constant dense<0.000000e+00> : vector<64x128xf32>
    %165 = tpu.matmul %163, %164, %cst_44 {dimension_numbers = #tpu.dot_dimension_numbers<[1], [0], [0], [1], [0, 0, 1, 1], [], []>} : vector<64x32xf32>, vector<32x128xf32>, vector<64x128xf32> -> vector<64x128xf32>
    %c0_45 = arith.constant 0 : index
    %c0_46 = arith.constant 0 : index
    %166 = vector.load %arg7[%c0_45, %c0_46] : memref<1x128xf32, #tpu.memory_space<vmem>>, vector<1x128xf32>
    %167 = vector.broadcast %166 : vector<1x128xf32> to vector<64x128xf32>
    %168 = arith.addf %165, %167 : vector<64x128xf32>
    %c0_47 = arith.constant 0 : index
    %c0_48 = arith.constant 0 : index
    %169 = vector.load %arg8[%c0_47, %c0_48] : memref<64x128xf32, #tpu.memory_space<vmem>>, vector<64x128xf32>
    tpu.vector_store %arg8[%c0_47, %c0_48], %168 {strides = array<i32>} : memref<64x128xf32, #tpu.memory_space<vmem>>, vector<64x128xf32>,
    return
  }
}

</mosaic_0001>

<llo_original>
// kernel: latent_predictor_forward.1
$region0: #{latent_predictor_forward.1}
  #allocation0 [shape = 'u32[]', space=smem, size = 0x4, offset = 0x4, fixed_abs, tag = 'smem constant byte address 0x4 - core index']
  #allocation1 [shape = 'u32[72,128]{1,0:T(1,128)}', space=vmem, size = 0x9000, scoped, tag = 'internal scratch']
  #allocation2 [shape = 'f32[64,32]{1,0:T(8,128)}', space=vmem, size = 0x8000, scoped, tag = 'scratch operand']
  %s0 = inlined_call_operand.vmem [shape: f32[64,16], index: 0, kind: input, shape index: {}]
  %s1 = inlined_call_operand.vmem [shape: f32[8,32], index: 1, kind: input, shape index: {}]
  %s2 = inlined_call_operand.vmem [shape: f32[8,32], index: 2, kind: input, shape index: {}]
  %s3 = inlined_call_operand.vmem [shape: f32[16,128], index: 3, kind: input, shape index: {}]
  %s4 = inlined_call_operand.vmem [shape: f32[32,128], index: 4, kind: input, shape index: {}]
  %s5 = inlined_call_operand.vmem [shape: f32[1,128], index: 5, kind: input, shape index: {}]
  %s6 = inlined_call_operand.vmem [shape: f32[32,128], index: 6, kind: input, shape index: {}]
  %s7 = inlined_call_operand.vmem [shape: f32[1,128], index: 7, kind: input, shape index: {}]
  %s8 = inlined_call_operand.vmem [shape: f32[64,128], index: 8, kind: output, shape index: {0}]
  %s9 = inlined_call_operand.vmem [shape: f32[8,32], index: 9, kind: output, shape index: {1}]
  %s10 = inlined_call_operand.vmem [shape: f32[8,32], index: 10, kind: output, shape index: {2}]
  %11 = xla_tuple %s8, %s9, %s10
  %s12 = sld [smem:[#allocation0]]
  $region58: #{latent_predictor_forward.1} parent=0
    _
  %s14 = ssub.s32 1, %s12
  %s15 = scalar_select 0, %s14, %s12
  // Predicated region
  $region2: #{latent_predictor_forward.1} parent=0 // pred_check
    _
  $region3: #{latent_predictor_forward.1} parent=0 // pred_check_branch
    %17 = sbr.rel (0) target = $region5
  $region4: #{latent_predictor_forward.1} parent=0 // pred_region
    _
  $region5: #{latent_predictor_forward.1} parent=0 // pred_fallthru
    _
  // Predicated region
  $region6: #{latent_predictor_forward.1} parent=0 // pred_check
    _
  $region7: #{latent_predictor_forward.1} parent=0 // pred_check_branch
    %19 = sbr.rel (0) target = $region9
  $region8: #{latent_predictor_forward.1} parent=0 // pred_region
    _
  $region9: #{latent_predictor_forward.1} parent=0 // pred_fallthru
    _
  // Predicated region
  $region10: #{latent_predictor_forward.1} parent=0 // pred_check
    _
  $region11: #{latent_predictor_forward.1} parent=0 // pred_check_branch
    %21 = sbr.rel (0) target = $region13
  $region12: #{latent_predictor_forward.1} parent=0 // pred_region
    _
  $region13: #{latent_predictor_forward.1} parent=0 // pred_fallthru
    _
  // Predicated region
  $region14: #{latent_predictor_forward.1} parent=0 // pred_check
    _
  $region15: #{latent_predictor_forward.1} parent=0 // pred_check_branch
    %23 = sbr.rel (0) target = $region17
  $region16: #{latent_predictor_forward.1} parent=0 // pred_region
    _
  $region17: #{latent_predictor_forward.1} parent=0 // pred_fallthru
    _
  // Predicated region
  $region18: #{latent_predictor_forward.1} parent=0 // pred_check
    _
  $region19: #{latent_predictor_forward.1} parent=0 // pred_check_branch
    %25 = sbr.rel (0) target = $region21
  $region20: #{latent_predictor_forward.1} parent=0 // pred_region
    _
  $region21: #{latent_predictor_forward.1} parent=0 // pred_fallthru
    _
  // Predicated region
  $region22: #{latent_predictor_forward.1} parent=0 // pred_check
    _
  $region23: #{latent_predictor_forward.1} parent=0 // pred_check_branch
    %27 = sbr.rel (0) target = $region25
  $region24: #{latent_predictor_forward.1} parent=0 // pred_region
    _
  $region25: #{latent_predictor_forward.1} parent=0 // pred_fallthru
    _
  // Predicated region
  $region26: #{latent_predictor_forward.1} parent=0 // pred_check
    _
  $region27: #{latent_predictor_forward.1} parent=0 // pred_check_branch
    %29 = sbr.rel (0) target = $region29
  $region28: #{latent_predictor_forward.1} parent=0 // pred_region
    _
  $region29: #{latent_predictor_forward.1} parent=0 // pred_fallthru
    _
  // Predicated region
  $region30: #{latent_predictor_forward.1} parent=0 // pred_check
    _
  $region31: #{latent_predictor_forward.1} parent=0 // pred_check_branch
    %31 = sbr.rel (0) target = $region33
  $region32: #{latent_predictor_forward.1} parent=0 // pred_region
    _
  $region33: #{latent_predictor_forward.1} parent=0 // pred_fallthru
    _
  %v32 = vld [vmem:[%s0] sm:$0xff]
  %v33 = vld [vmem:[%s0 + $0x8] sm:$0xff]
  %v34 = vld [vmem:[%s0 + $0x10] sm:$0xff]
  %v35 = vld [vmem:[%s0 + $0x18] sm:$0xff]
  %v36 = vld [vmem:[%s0 + $0x20] sm:$0xff]
  %v37 = vld [vmem:[%s0 + $0x28] sm:$0xff]
  %v38 = vld [vmem:[%s0 + $0x30] sm:$0xff]
  %v39 = vld [vmem:[%s0 + $0x38] sm:$0xff]
  %v40 = vld [vmem:[%s3] sm:$0xff]
  %v41 = vld [vmem:[%s3 + $0x8] sm:$0xff]
  %v42 = vld [vmem:[%s5] sm:$0x1]
  %v44 = vperm.slane %v42, 0
  %vm46 = vcmask 130048
  %v48 = vsel %vm46, %v32, 0
  %v51 = vsel %vm46, %v33, 0
  %v54 = vsel %vm46, %v34, 0
  %v57 = vsel %vm46, %v35, 0
  %v60 = vsel %vm46, %v36, 0
  %v63 = vsel %vm46, %v37, 0
  %v66 = vsel %vm46, %v38, 0
  %v69 = vsel %vm46, %v39, 0
  %71 = vmatpush.msra.mxu0 0.0
  %72 = vmatpush.msra.mxu0 0.0
  %73 = vmatpush.msra.mxu0 0.0
  %74 = vmatpush.msra.mxu0 0.0
  %75 = vmatpush.msra.mxu0 0.0
  %76 = vmatpush.msra.mxu0 0.0
  %77 = vmatpush.msra.mxu0 0.0
  %78 = vmatpush.msra.mxu0 0.0
  %79 = vmatpush.msra.mxu0 0.0
  %80 = vmatpush.msra.mxu0 0.0
  %81 = vmatpush.msra.mxu0 0.0
  %82 = vmatpush.msra.mxu0 0.0
  %83 = vmatpush.msra.mxu0 0.0
  %84 = vmatpush.msra.mxu0 0.0
  %85 = vmatpush.msra.mxu0 %v41
  %86 = vmatpush.msra.mxu0 %v40
  %87 = vmatmul.f32.gmra.mxu0 %v48
  %v88 = vpop.f32.mrf.mxu0
  %v89 = vadd.f32 %v44, %v88
  %90 = vmatmul.f32.gmra.mxu0 %v51
  %v91 = vpop.f32.mrf.mxu0
  %v92 = vadd.f32 %v44, %v91
  %93 = vmatmul.f32.gmra.mxu0 %v54
  %v94 = vpop.f32.mrf.mxu0
  %v95 = vadd.f32 %v44, %v94
  %96 = vmatmul.f32.gmra.mxu0 %v57
  %v97 = vpop.f32.mrf.mxu0
  %v98 = vadd.f32 %v44, %v97
  %99 = vmatmul.f32.gmra.mxu0 %v60
  %v100 = vpop.f32.mrf.mxu0
  %v101 = vadd.f32 %v44, %v100
  %102 = vmatmul.f32.gmra.mxu0 %v63
  %v103 = vpop.f32.mrf.mxu0
  %v104 = vadd.f32 %v44, %v103
  %105 = vmatmul.f32.gmra.mxu0 %v66
  %v106 = vpop.f32.mrf.mxu0
  %v107 = vadd.f32 %v44, %v106
  %108 = vmatmul.f32.gmra.mxu0 %v69
  %v109 = vpop.f32.mrf.mxu0
  %v110 = vadd.f32 %v44, %v109
  %111 = vdwg.mxu0
  %v112 = vld [vmem:[%s4] sm:$0xff]
  %v113 = vld [vmem:[%s4 + $0x8] sm:$0xff]
  %v114 = vld [vmem:[%s4 + $0x10] sm:$0xff]
  %v115 = vld [vmem:[%s4 + $0x18] sm:$0xff]
  %v116 = vld [vmem:[%s1] sm:$0xff]
  %v117 = vld [vmem:[%s2] sm:$0xff]
  %vm118 = vcmask 261120
  %v120 = vsel %vm118, %v116, 0
  %122 = vmatpush.msra.mxu0 0.0
  %123 = vmatpush.msra.mxu0 0.0
  %124 = vmatpush.msra.mxu0 0.0
  %125 = vmatpush.msra.mxu0 0.0
  %126 = vmatpush.msra.mxu0 0.0
  %127 = vmatpush.msra.mxu0 0.0
  %128 = vmatpush.msra.mxu0 0.0
  %129 = vmatpush.msra.mxu0 0.0
  %130 = vmatpush.msra.mxu0 0.0
  %131 = vmatpush.msra.mxu0 0.0
  %132 = vmatpush.msra.mxu0 0.0
  %133 = vmatpush.msra.mxu0 0.0
  %134 = vmatpush.msra.mxu0 %v115
  %135 = vmatpush.msra.mxu0 %v114
  %136 = vmatpush.msra.mxu0 %v113
  %137 = vmatpush.msra.mxu0 %v112
  %138 = vmatmul.f32.gmra.mxu0 %v120
  %v139 = vpop.f32.mrf.mxu0
  %v140 = vadd.f32 0.0, %v139
  %141 = vdwg.mxu0
  %v142 = vadd.f32 %v89, %v140
  %v143 = vxor.u32 %v142, 2147483648
  %v144 = vmul.f32 %v143, 1.442695
  %v145 = vpow.pop %v144
  %v146 = vadd.f32 %v145, 1.0
  %v147 = vrcp.pop %v146
  %v148 = vmul.f32 %v146, %v147
  %v149 = vsub.f32 1.0, %v148
  %v150 = vmul.f32 %v147, %v149
  %v151 = vadd.f32 %v147, %v150
  %vm152 = vweird.f32 %v146
  %vm153 = vweird.f32 %v147
  %vm154 = vmor %vm152, %vm153
  %v155 = vsel %vm154, %v147, %v151
  %v156 = vand.u32 2147483647, %v146
  %vm157 = vcmp.eq.f32.partialorder %v156, 8.507059e+37
  %v158 = vand.u32 %v146, 2147483648
  %v159 = vor.u32 1.1754944e-38, %v158
  %v160 = vsel %vm157, %v159, %v155
  %v161 = vmul.f32 1.0, %v160
  %v162 = vtanh.pop %v142
  %164 = vrot.lane.b32.xlu0 %v117, 32
  %v165 = vpop.permute.xlu0 %164
  %v167 = vmul.f32 %v161, %v165
  %169 = vrot.lane.b32.xlu0 %v162, 64
  %v170 = vpop.permute.xlu0 %169
  %v172 = vmul.f32 %v161, %v170
  %174 = vrot.lane.b32.xlu0 %v172, 32
  %v175 = vpop.permute.xlu0 %174
  %v177 = vadd.f32 %v167, %v175
  %v178 = vtanh.pop %v177
  %180 = vrot.lane.b32.xlu0 %v178, 64
  %v181 = vpop.permute.xlu0 %180
  %v183 = vmul.f32 %v161, %v181
  %185 = vrot.lane.b32.xlu0 %v183, 32
  %v186 = vpop.permute.xlu0 %185
  %188 = vst.msk [vmem:[#allocation2] sm:$0xff] %vm118, %v186
  %v189 = vsel %vm118, %v186, 0
  %191 = vmatpush.msra.mxu0 0.0
  %192 = vmatpush.msra.mxu0 0.0
  %193 = vmatpush.msra.mxu0 0.0
  %194 = vmatpush.msra.mxu0 0.0
  %195 = vmatpush.msra.mxu0 0.0
  %196 = vmatpush.msra.mxu0 0.0
  %197 = vmatpush.msra.mxu0 0.0
  %198 = vmatpush.msra.mxu0 0.0
  %199 = vmatpush.msra.mxu0 0.0
  %200 = vmatpush.msra.mxu0 0.0
  %201 = vmatpush.msra.mxu0 0.0
  %202 = vmatpush.msra.mxu0 0.0
  %203 = vmatpush.msra.mxu0 %v115
  %204 = vmatpush.msra.mxu0 %v114
  %205 = vmatpush.msra.mxu0 %v113
  %206 = vmatpush.msra.mxu0 %v112
  %207 = vmatmul.f32.gmra.mxu0 %v189
  %v208 = vpop.f32.mrf.mxu0
  %v209 = vadd.f32 0.0, %v208
  %210 = vdwg.mxu0
  %v211 = vadd.f32 %v92, %v209
  %v212 = vxor.u32 %v211, 2147483648
  %v213 = vmul.f32 %v212, 1.442695
  %v214 = vpow.pop %v213
  %v215 = vadd.f32 %v214, 1.0
  %v216 = vrcp.pop %v215
  %v217 = vmul.f32 %v215, %v216
  %v218 = vsub.f32 1.0, %v217
  %v219 = vmul.f32 %v216, %v218
  %v220 = vadd.f32 %v216, %v219
  %vm221 = vweird.f32 %v215
  %vm222 = vweird.f32 %v216
  %vm223 = vmor %vm221, %vm222
  %v224 = vsel %vm223, %v216, %v220
  %v225 = vand.u32 2147483647, %v215
  %vm226 = vcmp.eq.f32.partialorder %v225, 8.507059e+37
  %v227 = vand.u32 %v215, 2147483648
  %v228 = vor.u32 1.1754944e-38, %v227
  %v229 = vsel %vm226, %v228, %v224
  %v230 = vmul.f32 1.0, %v229
  %v231 = vtanh.pop %v211
  %v232 = vmul.f32 %v230, %v177
  %234 = vrot.lane.b32.xlu0 %v231, 64
  %v235 = vpop.permute.xlu0 %234
  %v237 = vmul.f32 %v230, %v235
  %239 = vrot.lane.b32.xlu0 %v237, 32
  %v240 = vpop.permute.xlu0 %239
  %v242 = vadd.f32 %v232, %v240
  %v243 = vtanh.pop %v242
  %245 = vrot.lane.b32.xlu0 %v243, 64
  %v246 = vpop.permute.xlu0 %245
  %v248 = vmul.f32 %v230, %v246
  %250 = vrot.lane.b32.xlu0 %v248, 32
  %v251 = vpop.permute.xlu0 %250
  %253 = vst.msk [vmem:[#allocation2 + $0x8] sm:$0xff] %vm118, %v251
  %v254 = vsel %vm118, %v251, 0
  %256 = vmatpush.msra.mxu0 0.0
  %257 = vmatpush.msra.mxu0 0.0
  %258 = vmatpush.msra.mxu0 0.0
  %259 = vmatpush.msra.mxu0 0.0
  %260 = vmatpush.msra.mxu0 0.0
  %261 = vmatpush.msra.mxu0 0.0
  %262 = vmatpush.msra.mxu0 0.0
  %263 = vmatpush.msra.mxu0 0.0
  %264 = vmatpush.msra.mxu0 0.0
  %265 = vmatpush.msra.mxu0 0.0
  %266 = vmatpush.msra.mxu0 0.0
  %267 = vmatpush.msra.mxu0 0.0
  %268 = vmatpush.msra.mxu0 %v115
  %269 = vmatpush.msra.mxu0 %v114
  %270 = vmatpush.msra.mxu0 %v113
  %271 = vmatpush.msra.mxu0 %v112
  %272 = vmatmul.f32.gmra.mxu0 %v254
  %v273 = vpop.f32.mrf.mxu0
  %v274 = vadd.f32 0.0, %v273
  %275 = vdwg.mxu0
  %v276 = vadd.f32 %v95, %v274
  %v277 = vxor.u32 %v276, 2147483648
  %v278 = vmul.f32 %v277, 1.442695
  %v279 = vpow.pop %v278
  %v280 = vadd.f32 %v279, 1.0
  %v281 = vrcp.pop %v280
  %v282 = vmul.f32 %v280, %v281
  %v283 = vsub.f32 1.0, %v282
  %v284 = vmul.f32 %v281, %v283
  %v285 = vadd.f32 %v281, %v284
  %vm286 = vweird.f32 %v280
  %vm287 = vweird.f32 %v281
  %vm288 = vmor %vm286, %vm287
  %v289 = vsel %vm288, %v281, %v285
  %v290 = vand.u32 2147483647, %v280
  %vm291 = vcmp.eq.f32.partialorder %v290, 8.507059e+37
  %v292 = vand.u32 %v280, 2147483648
  %v293 = vor.u32 1.1754944e-38, %v292
  %v294 = vsel %vm291, %v293, %v289
  %v295 = vmul.f32 1.0, %v294
  %v296 = vtanh.pop %v276
  %v297 = vmul.f32 %v295, %v242
  %299 = vrot.lane.b32.xlu0 %v296, 64
  %v300 = vpop.permute.xlu0 %299
  %v302 = vmul.f32 %v295, %v300
  %304 = vrot.lane.b32.xlu0 %v302, 32
  %v305 = vpop.permute.xlu0 %304
  %v307 = vadd.f32 %v297, %v305
  %v308 = vtanh.pop %v307
  %310 = vrot.lane.b32.xlu0 %v308, 64
  %v311 = vpop.permute.xlu0 %310
  %v313 = vmul.f32 %v295, %v311
  %315 = vrot.lane.b32.xlu0 %v313, 32
  %v316 = vpop.permute.xlu0 %315
  %318 = vst.msk [vmem:[#allocation2 + $0x10] sm:$0xff] %vm118, %v316
  %v319 = vsel %vm118, %v316, 0
  %321 = vmatpush.msra.mxu0 0.0
  %322 = vmatpush.msra.mxu0 0.0
  %323 = vmatpush.msra.mxu0 0.0
  %324 = vmatpush.msra.mxu0 0.0
  %325 = vmatpush.msra.mxu0 0.0
  %326 = vmatpush.msra.mxu0 0.0
  %327 = vmatpush.msra.mxu0 0.0
  %328 = vmatpush.msra.mxu0 0.0
  %329 = vmatpush.msra.mxu0 0.0
  %330 = vmatpush.msra.mxu0 0.0
  %331 = vmatpush.msra.mxu0 0.0
  %332 = vmatpush.msra.mxu0 0.0
  %333 = vmatpush.msra.mxu0 %v115
  %334 = vmatpush.msra.mxu0 %v114
  %335 = vmatpush.msra.mxu0 %v113
  %336 = vmatpush.msra.mxu0 %v112
  %337 = vmatmul.f32.gmra.mxu0 %v319
  %v338 = vpop.f32.mrf.mxu0
  %v339 = vadd.f32 0.0, %v338
  %340 = vdwg.mxu0
  %v341 = vadd.f32 %v98, %v339
  %v342 = vxor.u32 %v341, 2147483648
  %v343 = vmul.f32 %v342, 1.442695
  %v344 = vpow.pop %v343
  %v345 = vadd.f32 %v344, 1.0
  %v346 = vrcp.pop %v345
  %v347 = vmul.f32 %v345, %v346
  %v348 = vsub.f32 1.0, %v347
  %v349 = vmul.f32 %v346, %v348
  %v350 = vadd.f32 %v346, %v349
  %vm351 = vweird.f32 %v345
  %vm352 = vweird.f32 %v346
  %vm353 = vmor %vm351, %vm352
  %v354 = vsel %vm353, %v346, %v350
  %v355 = vand.u32 2147483647, %v345
  %vm356 = vcmp.eq.f32.partialorder %v355, 8.507059e+37
  %v357 = vand.u32 %v345, 2147483648
  %v358 = vor.u32 1.1754944e-38, %v357
  %v359 = vsel %vm356, %v358, %v354
  %v360 = vmul.f32 1.0, %v359
  %v361 = vtanh.pop %v341
  %v362 = vmul.f32 %v360, %v307
  %364 = vrot.lane.b32.xlu0 %v361, 64
  %v365 = vpop.permute.xlu0 %364
  %v367 = vmul.f32 %v360, %v365
  %369 = vrot.lane.b32.xlu0 %v367, 32
  %v370 = vpop.permute.xlu0 %369
  %v372 = vadd.f32 %v362, %v370
  %v373 = vtanh.pop %v372
  %375 = vrot.lane.b32.xlu0 %v373, 64
  %v376 = vpop.permute.xlu0 %375
  %v378 = vmul.f32 %v360, %v376
  %380 = vrot.lane.b32.xlu0 %v378, 32
  %v381 = vpop.permute.xlu0 %380
  %383 = vst.msk [vmem:[#allocation2 + $0x18] sm:$0xff] %vm118, %v381
  %v384 = vsel %vm118, %v381, 0
  %386 = vmatpush.msra.mxu0 0.0
  %387 = vmatpush.msra.mxu0 0.0
  %388 = vmatpush.msra.mxu0 0.0
  %389 = vmatpush.msra.mxu0 0.0
  %390 = vmatpush.msra.mxu0 0.0
  %391 = vmatpush.msra.mxu0 0.0
  %392 = vmatpush.msra.mxu0 0.0
  %393 = vmatpush.msra.mxu0 0.0
  %394 = vmatpush.msra.mxu0 0.0
  %395 = vmatpush.msra.mxu0 0.0
  %396 = vmatpush.msra.mxu0 0.0
  %397 = vmatpush.msra.mxu0 0.0
  %398 = vmatpush.msra.mxu0 %v115
  %399 = vmatpush.msra.mxu0 %v114
  %400 = vmatpush.msra.mxu0 %v113
  %401 = vmatpush.msra.mxu0 %v112
  %402 = vmatmul.f32.gmra.mxu0 %v384
  %v403 = vpop.f32.mrf.mxu0
  %v404 = vadd.f32 0.0, %v403
  %405 = vdwg.mxu0
  %v406 = vadd.f32 %v101, %v404
  %v407 = vxor.u32 %v406, 2147483648
  %v408 = vmul.f32 %v407, 1.442695
  %v409 = vpow.pop %v408
  %v410 = vadd.f32 %v409, 1.0
  %v411 = vrcp.pop %v410
  %v412 = vmul.f32 %v410, %v411
  %v413 = vsub.f32 1.0, %v412
  %v414 = vmul.f32 %v411, %v413
  %v415 = vadd.f32 %v411, %v414
  %vm416 = vweird.f32 %v410
  %vm417 = vweird.f32 %v411
  %vm418 = vmor %vm416, %vm417
  %v419 = vsel %vm418, %v411, %v415
  %v420 = vand.u32 2147483647, %v410
  %vm421 = vcmp.eq.f32.partialorder %v420, 8.507059e+37
  %v422 = vand.u32 %v410, 2147483648
  %v423 = vor.u32 1.1754944e-38, %v422
  %v424 = vsel %vm421, %v423, %v419
  %v425 = vmul.f32 1.0, %v424
  %v426 = vtanh.pop %v406
  %v427 = vmul.f32 %v425, %v372
  %429 = vrot.lane.b32.xlu0 %v426, 64
  %v430 = vpop.permute.xlu0 %429
  %v432 = vmul.f32 %v425, %v430
  %434 = vrot.lane.b32.xlu0 %v432, 32
  %v435 = vpop.permute.xlu0 %434
  %v437 = vadd.f32 %v427, %v435
  %v438 = vtanh.pop %v437
  %440 = vrot.lane.b32.xlu0 %v438, 64
  %v441 = vpop.permute.xlu0 %440
  %v443 = vmul.f32 %v425, %v441
  %445 = vrot.lane.b32.xlu0 %v443, 32
  %v446 = vpop.permute.xlu0 %445
  %448 = vst.msk [vmem:[#allocation2 + $0x20] sm:$0xff] %vm118, %v446
  %v449 = vsel %vm118, %v446, 0
  %451 = vmatpush.msra.mxu0 0.0
  %452 = vmatpush.msra.mxu0 0.0
  %453 = vmatpush.msra.mxu0 0.0
  %454 = vmatpush.msra.mxu0 0.0
  %455 = vmatpush.msra.mxu0 0.0
  %456 = vmatpush.msra.mxu0 0.0
  %457 = vmatpush.msra.mxu0 0.0
  %458 = vmatpush.msra.mxu0 0.0
  %459 = vmatpush.msra.mxu0 0.0
  %460 = vmatpush.msra.mxu0 0.0
  %461 = vmatpush.msra.mxu0 0.0
  %462 = vmatpush.msra.mxu0 0.0
  %463 = vmatpush.msra.mxu0 %v115
  %464 = vmatpush.msra.mxu0 %v114
  %465 = vmatpush.msra.mxu0 %v113
  %466 = vmatpush.msra.mxu0 %v112
  %467 = vmatmul.f32.gmra.mxu0 %v449
  %v468 = vpop.f32.mrf.mxu0
  %v469 = vadd.f32 0.0, %v468
  %470 = vdwg.mxu0
  %v471 = vadd.f32 %v104, %v469
  %v472 = vxor.u32 %v471, 2147483648
  %v473 = vmul.f32 %v472, 1.442695
  %v474 = vpow.pop %v473
  %v475 = vadd.f32 %v474, 1.0
  %v476 = vrcp.pop %v475
  %v477 = vmul.f32 %v475, %v476
  %v478 = vsub.f32 1.0, %v477
  %v479 = vmul.f32 %v476, %v478
  %v480 = vadd.f32 %v476, %v479
  %vm481 = vweird.f32 %v475
  %vm482 = vweird.f32 %v476
  %vm483 = vmor %vm481, %vm482
  %v484 = vsel %vm483, %v476, %v480
  %v485 = vand.u32 2147483647, %v475
  %vm486 = vcmp.eq.f32.partialorder %v485, 8.507059e+37
  %v487 = vand.u32 %v475, 2147483648
  %v488 = vor.u32 1.1754944e-38, %v487
  %v489 = vsel %vm486, %v488, %v484
  %v490 = vmul.f32 1.0, %v489
  %v491 = vtanh.pop %v471
  %v492 = vmul.f32 %v490, %v437
  %494 = vrot.lane.b32.xlu0 %v491, 64
  %v495 = vpop.permute.xlu0 %494
  %v497 = vmul.f32 %v490, %v495
  %499 = vrot.lane.b32.xlu0 %v497, 32
  %v500 = vpop.permute.xlu0 %499
  %v502 = vadd.f32 %v492, %v500
  %v503 = vtanh.pop %v502
  %505 = vrot.lane.b32.xlu0 %v503, 64
  %v506 = vpop.permute.xlu0 %505
  %v508 = vmul.f32 %v490, %v506
  %510 = vrot.lane.b32.xlu0 %v508, 32
  %v511 = vpop.permute.xlu0 %510
  %513 = vst.msk [vmem:[#allocation2 + $0x28] sm:$0xff] %vm118, %v511
  %v514 = vsel %vm118, %v511, 0
  %516 = vmatpush.msra.mxu0 0.0
  %517 = vmatpush.msra.mxu0 0.0
  %518 = vmatpush.msra.mxu0 0.0
  %519 = vmatpush.msra.mxu0 0.0
  %520 = vmatpush.msra.mxu0 0.0
  %521 = vmatpush.msra.mxu0 0.0
  %522 = vmatpush.msra.mxu0 0.0
  %523 = vmatpush.msra.mxu0 0.0
  %524 = vmatpush.msra.mxu0 0.0
  %525 = vmatpush.msra.mxu0 0.0
  %526 = vmatpush.msra.mxu0 0.0
  %527 = vmatpush.msra.mxu0 0.0
  %528 = vmatpush.msra.mxu0 %v115
  %529 = vmatpush.msra.mxu0 %v114
  %530 = vmatpush.msra.mxu0 %v113
  %531 = vmatpush.msra.mxu0 %v112
  %532 = vmatmul.f32.gmra.mxu0 %v514
  %v533 = vpop.f32.mrf.mxu0
  %v534 = vadd.f32 0.0, %v533
  %535 = vdwg.mxu0
  %v536 = vadd.f32 %v107, %v534
  %v537 = vxor.u32 %v536, 2147483648
  %v538 = vmul.f32 %v537, 1.442695
  %v539 = vpow.pop %v538
  %v540 = vadd.f32 %v539, 1.0
  %v541 = vrcp.pop %v540
  %v542 = vmul.f32 %v540, %v541
  %v543 = vsub.f32 1.0, %v542
  %v544 = vmul.f32 %v541, %v543
  %v545 = vadd.f32 %v541, %v544
  %vm546 = vweird.f32 %v540
  %vm547 = vweird.f32 %v541
  %vm548 = vmor %vm546, %vm547
  %v549 = vsel %vm548, %v541, %v545
  %v550 = vand.u32 2147483647, %v540
  %vm551 = vcmp.eq.f32.partialorder %v550, 8.507059e+37
  %v552 = vand.u32 %v540, 2147483648
  %v553 = vor.u32 1.1754944e-38, %v552
  %v554 = vsel %vm551, %v553, %v549
  %v555 = vmul.f32 1.0, %v554
  %v556 = vtanh.pop %v536
  %v557 = vmul.f32 %v555, %v502
  %559 = vrot.lane.b32.xlu0 %v556, 64
  %v560 = vpop.permute.xlu0 %559
  %v562 = vmul.f32 %v555, %v560
  %564 = vrot.lane.b32.xlu0 %v562, 32
  %v565 = vpop.permute.xlu0 %564
  %v567 = vadd.f32 %v557, %v565
  %v568 = vtanh.pop %v567
  %570 = vrot.lane.b32.xlu0 %v568, 64
  %v571 = vpop.permute.xlu0 %570
  %v573 = vmul.f32 %v555, %v571
  %575 = vrot.lane.b32.xlu0 %v573, 32
  %v576 = vpop.permute.xlu0 %575
  %578 = vst.msk [vmem:[#allocation2 + $0x30] sm:$0xff] %vm118, %v576
  %v579 = vsel %vm118, %v576, 0
  %581 = vmatpush.msra.mxu0 0.0
  %582 = vmatpush.msra.mxu0 0.0
  %583 = vmatpush.msra.mxu0 0.0
  %584 = vmatpush.msra.mxu0 0.0
  %585 = vmatpush.msra.mxu0 0.0
  %586 = vmatpush.msra.mxu0 0.0
  %587 = vmatpush.msra.mxu0 0.0
  %588 = vmatpush.msra.mxu0 0.0
  %589 = vmatpush.msra.mxu0 0.0
  %590 = vmatpush.msra.mxu0 0.0
  %591 = vmatpush.msra.mxu0 0.0
  %592 = vmatpush.msra.mxu0 0.0
  %593 = vmatpush.msra.mxu0 %v115
  %594 = vmatpush.msra.mxu0 %v114
  %595 = vmatpush.msra.mxu0 %v113
  %596 = vmatpush.msra.mxu0 %v112
  %597 = vmatmul.f32.gmra.mxu0 %v579
  %v598 = vpop.f32.mrf.mxu0
  %v599 = vadd.f32 0.0, %v598
  %600 = vdwg.mxu0
  %v601 = vadd.f32 %v110, %v599
  %v602 = vxor.u32 %v601, 2147483648
  %v603 = vmul.f32 %v602, 1.442695
  %v604 = vpow.pop %v603
  %v605 = vadd.f32 %v604, 1.0
  %v606 = vrcp.pop %v605
  %v607 = vmul.f32 %v605, %v606
  %v608 = vsub.f32 1.0, %v607
  %v609 = vmul.f32 %v606, %v608
  %v610 = vadd.f32 %v606, %v609
  %vm611 = vweird.f32 %v605
  %vm612 = vweird.f32 %v606
  %vm613 = vmor %vm611, %vm612
  %v614 = vsel %vm613, %v606, %v610
  %v615 = vand.u32 2147483647, %v605
  %vm616 = vcmp.eq.f32.partialorder %v615, 8.507059e+37
  %v617 = vand.u32 %v605, 2147483648
  %v618 = vor.u32 1.1754944e-38, %v617
  %v619 = vsel %vm616, %v618, %v614
  %v620 = vmul.f32 1.0, %v619
  %v621 = vtanh.pop %v601
  %v622 = vmul.f32 %v620, %v567
  %624 = vrot.lane.b32.xlu0 %v621, 64
  %v625 = vpop.permute.xlu0 %624
  %v627 = vmul.f32 %v620, %v625
  %629 = vrot.lane.b32.xlu0 %v627, 32
  %v630 = vpop.permute.xlu0 %629
  %v632 = vadd.f32 %v622, %v630
  %v633 = vtanh.pop %v632
  %635 = vrot.lane.b32.xlu0 %v633, 64
  %v636 = vpop.permute.xlu0 %635
  %v638 = vmul.f32 %v620, %v636
  %640 = vrot.lane.b32.xlu0 %v638, 32
  %v641 = vpop.permute.xlu0 %640
  %643 = vst.msk [vmem:[#allocation2 + $0x38] sm:$0xff] %vm118, %v641
  %644 = vst.msk [vmem:[%s9] sm:$0xff] %vm118, %v641
  %646 = vrot.lane.b32.xlu0 %v632, 96
  %v647 = vpop.permute.xlu0 %646
  %649 = vst.msk [vmem:[%s10] sm:$0xff] %vm118, %v647
  %v650 = vld [vmem:[#allocation2] sm:$0xff]
  %v651 = vld [vmem:[#allocation2 + $0x8] sm:$0xff]
  %v652 = vld [vmem:[#allocation2 + $0x10] sm:$0xff]
  %v653 = vld [vmem:[#allocation2 + $0x18] sm:$0xff]
  %v654 = vld [vmem:[#allocation2 + $0x20] sm:$0xff]
  %v655 = vld [vmem:[#allocation2 + $0x28] sm:$0xff]
  %v656 = vld [vmem:[#allocation2 + $0x30] sm:$0xff]
  %v657 = vld [vmem:[#allocation2 + $0x38] sm:$0xff]
  %v658 = vld [vmem:[%s6] sm:$0xff]
  %v659 = vld [vmem:[%s6 + $0x8] sm:$0xff]
  %v660 = vld [vmem:[%s6 + $0x10] sm:$0xff]
  %v661 = vld [vmem:[%s6 + $0x18] sm:$0xff]
  %v662 = vld [vmem:[%s7] sm:$0x1]
  %v664 = vperm.slane %v662, 0
  %v667 = vsel %vm118, %v650, 0
  %v670 = vsel %vm118, %v651, 0
  %v673 = vsel %vm118, %v652, 0
  %v676 = vsel %vm118, %v653, 0
  %v679 = vsel %vm118, %v654, 0
  %v682 = vsel %vm118, %v655, 0
  %v685 = vsel %vm118, %v656, 0
  %v688 = vsel %vm118, %v657, 0
  %690 = vmatpush.msra.mxu0 0.0
  %691 = vmatpush.msra.mxu0 0.0
  %692 = vmatpush.msra.mxu0 0.0
  %693 = vmatpush.msra.mxu0 0.0
  %694 = vmatpush.msra.mxu0 0.0
  %695 = vmatpush.msra.mxu0 0.0
  %696 = vmatpush.msra.mxu0 0.0
  %697 = vmatpush.msra.mxu0 0.0
  %698 = vmatpush.msra.mxu0 0.0
  %699 = vmatpush.msra.mxu0 0.0
  %700 = vmatpush.msra.mxu0 0.0
  %701 = vmatpush.msra.mxu0 0.0
  %702 = vmatpush.msra.mxu0 %v661
  %703 = vmatpush.msra.mxu0 %v660
  %704 = vmatpush.msra.mxu0 %v659
  %705 = vmatpush.msra.mxu0 %v658
  %706 = vmatmul.f32.gmra.mxu0 %v667
  %v707 = vpop.f32.mrf.mxu0
  %v708 = vadd.f32 %v664, %v707
  %709 = vmatmul.f32.gmra.mxu0 %v670
  %v710 = vpop.f32.mrf.mxu0
  %v711 = vadd.f32 %v664, %v710
  %712 = vmatmul.f32.gmra.mxu0 %v673
  %v713 = vpop.f32.mrf.mxu0
  %v714 = vadd.f32 %v664, %v713
  %715 = vmatmul.f32.gmra.mxu0 %v676
  %v716 = vpop.f32.mrf.mxu0
  %v717 = vadd.f32 %v664, %v716
  %718 = vmatmul.f32.gmra.mxu0 %v679
  %v719 = vpop.f32.mrf.mxu0
  %v720 = vadd.f32 %v664, %v719
  %721 = vmatmul.f32.gmra.mxu0 %v682
  %v722 = vpop.f32.mrf.mxu0
  %v723 = vadd.f32 %v664, %v722
  %724 = vmatmul.f32.gmra.mxu0 %v685
  %v725 = vpop.f32.mrf.mxu0
  %v726 = vadd.f32 %v664, %v725
  %727 = vmatmul.f32.gmra.mxu0 %v688
  %v728 = vpop.f32.mrf.mxu0
  %v729 = vadd.f32 %v664, %v728
  %730 = vdwg.mxu0
  %731 = vst [vmem:[%s8] sm:$0xff] %v708
  %732 = vst [vmem:[%s8 + $0x8] sm:$0xff] %v711
  %733 = vst [vmem:[%s8 + $0x10] sm:$0xff] %v714
  %734 = vst [vmem:[%s8 + $0x18] sm:$0xff] %v717
  %735 = vst [vmem:[%s8 + $0x20] sm:$0xff] %v720
  %736 = vst [vmem:[%s8 + $0x28] sm:$0xff] %v723
  %737 = vst [vmem:[%s8 + $0x30] sm:$0xff] %v726
  %738 = vst [vmem:[%s8 + $0x38] sm:$0xff] %v729
  // Predicated region
  $region34: #{latent_predictor_forward.1} parent=0 // pred_check
    _
  $region35: #{latent_predictor_forward.1} parent=0 // pred_check_branch
    %740 = sbr.rel (0) target = $region37
  $region36: #{latent_predictor_forward.1} parent=0 // pred_region
    _
  $region37: #{latent_predictor_forward.1} parent=0 // pred_fallthru
    _
  // Predicated region
  $region38: #{latent_predictor_forward.1} parent=0 // pred_check
    _
  $region39: #{latent_predictor_forward.1} parent=0 // pred_check_branch
    %742 = sbr.rel (0) target = $region41
  $region40: #{latent_predictor_forward.1} parent=0 // pred_region
    _
  $region41: #{latent_predictor_forward.1} parent=0 // pred_fallthru
    _
  // Predicated region
  $region42: #{latent_predictor_forward.1} parent=0 // pred_check
    _
  $region43: #{latent_predictor_forward.1} parent=0 // pred_check_branch
    %744 = sbr.rel (0) target = $region45
  $region44: #{latent_predictor_forward.1} parent=0 // pred_region
    _
  $region45: #{latent_predictor_forward.1} parent=0 // pred_fallthru
    _
  // Predicated region
  $region46: #{latent_predictor_forward.1} parent=0 // pred_check
    _
  $region47: #{latent_predictor_forward.1} parent=0 // pred_check_branch
    %746 = sbr.rel (0) target = $region49
  $region48: #{latent_predictor_forward.1} parent=0 // pred_region
    _
  $region49: #{latent_predictor_forward.1} parent=0 // pred_fallthru
    _
  // Predicated region
  $region50: #{latent_predictor_forward.1} parent=0 // pred_check
    _
  $region51: #{latent_predictor_forward.1} parent=0 // pred_check_branch
    %748 = sbr.rel (0) target = $region53
  $region52: #{latent_predictor_forward.1} parent=0 // pred_region
    _
  $region53: #{latent_predictor_forward.1} parent=0 // pred_fallthru
    _
  // Predicated region
  $region54: #{latent_predictor_forward.1} parent=0 // pred_check
    _
  $region55: #{latent_predictor_forward.1} parent=0 // pred_check_branch
    %750 = sbr.rel (0) target = $region57
  $region56: #{latent_predictor_forward.1} parent=0 // pred_region
    _
  $region57: #{latent_predictor_forward.1} parent=0 // pred_fallthru
    _

</llo_original>
